<compile_context>
chip_gen: v6e
topology: v6e:2x2x1
jax: 0.10.0
libtpu: 0.0.40
codegen_flags: <defaults>
</compile_context>

<pallas_src>
import functools

import jax
import jax.numpy as jnp
from jax import lax
from jax.experimental import pallas as pl
from jax.experimental.pallas import tpu as pltpu


def _focal_loss_kernel(x_ref, t_ref, o_ref, *, gamma, n_total, tn):
    # x_ref: (TN, C) logits tile; t_ref: (TN, 1) int32 targets; o_ref: (8, 128)
    # per-tile partial-sum block (value broadcast across the block).
    i = pl.program_id(0)

    x = x_ref[...].astype(jnp.float32)            # (TN, C) f32 compute
    t = t_ref[...]                                # (TN, 1) int32

    # Numerically-stable log-softmax pieces along the class (lane) axis.
    m = jnp.max(x, axis=1, keepdims=True)         # (TN, 1)
    z = x - m                                     # (TN, C)
    lse = jnp.log(jnp.sum(jnp.exp(z), axis=1, keepdims=True))  # (TN, 1)

    # Gather z[n, target[n]] via a one-hot masked sum (no dynamic gather on TPU),
    # then form log p_t. Focal weighting happens only on this (TN, 1) column.
    cls_idx = lax.broadcasted_iota(jnp.int32, z.shape, 1)       # (TN, C)
    z_t = jnp.sum(jnp.where(cls_idx == t, z, 0.0), axis=1, keepdims=True)
    logpt_t = z_t - lse                           # (TN, 1) == log_softmax at target
    pt_t = jnp.exp(logpt_t)                       # (TN, 1)

    one_minus = 1.0 - pt_t
    if isinstance(gamma, int):
        focal_w = lax.integer_pow(one_minus, gamma)
    else:
        focal_w = jnp.power(one_minus, jnp.float32(gamma))
    picked = focal_w * logpt_t                    # (TN, 1)

    # Mask rows beyond N (last partial tile). `where` is a select, so any
    # garbage in padded rows cannot propagate.
    row = i * tn + lax.broadcasted_iota(jnp.int32, picked.shape, 0)
    picked = jnp.where(row < n_total, picked, 0.0)

    # Lane-dense per-tile partial (broadcast scalar across the (8,128) block).
    o_ref[...] = jnp.full((8, 128), jnp.sum(picked), dtype=jnp.float32)


def _choose_tile_n(n, c, itemsize):
    """Pick TN so the logits tile is ~2 MiB (safe double-buffered on all gens)."""
    target_bytes = 2 * 1024 * 1024
    tn = max(8, target_bytes // max(1, c * itemsize))
    tn = max(8, (int(tn) // 8) * 8)
    tn = min(tn, 2048)
    if n <= tn:
        return n          # full dim -> no (8,128) divisibility requirement
    return tn             # multiple of 8 by construction


def multiclass_focal_loss(logits, target, gamma=2, tn=None):
    """logits: [N, C] float (f32 or bf16), target: [N] int -> scalar f32 loss."""
    N, C = logits.shape
    if tn is None:
        tn = _choose_tile_n(N, C, jnp.dtype(logits.dtype).itemsize)
    tn = min(int(tn), N)
    if tn != N and tn % 8 != 0:
        tn = max(8, (tn // 8) * 8)
    num_tiles = pl.cdiv(N, tn)

    t2d = target.astype(jnp.int32).reshape(N, 1)

    kernel = functools.partial(_focal_loss_kernel, gamma=gamma, n_total=N, tn=tn)
    partials = pl.pallas_call(
        kernel,
        out_shape=jax.ShapeDtypeStruct((num_tiles * 8, 128), jnp.float32),
        grid_spec=pltpu.PrefetchScalarGridSpec(
            num_scalar_prefetch=0,
            grid=(num_tiles,),
            in_specs=[
                pl.BlockSpec((tn, C), lambda i: (i, 0)),   # logits tile
                pl.BlockSpec((tn, 1), lambda i: (i, 0)),   # targets tile
            ],
            out_specs=pl.BlockSpec((8, 128), lambda i: (i, 0)),
        ),
        compiler_params=pltpu.CompilerParams(
            dimension_semantics=("parallel",),
            vmem_limit_bytes=32 * 1024 * 1024,
        ),
    )(logits, t2d)

    # Tiny final reduce in plain JAX: one partial per tile lives at [8*i, 0].
    total = jnp.sum(partials[::8, 0])
    return -total / jnp.float32(N)


def _reference(logits, target, gamma=2):
    logits = logits.astype(jnp.float32)
    logpt = jax.nn.log_softmax(logits, axis=1)
    pt = jnp.exp(logpt)
    logpt = (1.0 - pt) ** gamma * logpt
    picked = jnp.take_along_axis(
        logpt, target[:, None].astype(jnp.int32), axis=1)[:, 0]
    return -jnp.mean(picked)


if __name__ == "__main__":
    # Small shapes consistent with the module: N samples, C classes.
    N, C = 20, 32
    key = jax.random.PRNGKey(0)
    kx, kt = jax.random.split(key)
    logits = jax.random.normal(kx, (N, C), dtype=jnp.float32)
    target = jax.random.randint(kt, (N,), 0, C, dtype=jnp.int32)

    ref = _reference(logits, target, gamma=2)

    # Default tile choice (single tile for this small N).
    loss = multiclass_focal_loss(logits, target, gamma=2)
    loss = jax.block_until_ready(loss)
    assert jnp.allclose(loss, ref, atol=1e-5, rtol=1e-5), (loss, ref)

    # Force multi-tile path (3 tiles, last one partial) to exercise tiling,
    # the parallel per-tile partials, and the out-of-range row masking.
    loss_tiled = multiclass_focal_loss(logits, target, gamma=2, tn=8)
    loss_tiled = jax.block_until_ready(loss_tiled)
    assert jnp.allclose(loss_tiled, ref, atol=1e-5, rtol=1e-5), (loss_tiled, ref)

    print("KERNEL_OK")
</pallas_src>

<mosaic_0001>
module attributes {stable_mosaic.version = 11 : i64} {
  func.func @_focal_loss_kernel(%arg0: i32, %arg1: memref<20x32xf32, #tpu.memory_space<vmem>>, %arg2: memref<20x1xi32, #tpu.memory_space<vmem>>, %arg3: memref<8x128xf32, #tpu.memory_space<vmem>>) attributes {dimension_semantics = [#tpu.dimension_semantics<parallel>], iteration_bounds = array<i64: 1>, scalar_prefetch = 0 : i64, scratch_operands = 0 : i64, tpu.core_type = #tpu.core_type<tc>, window_params = [{transform_indices = @transform_0, window_bounds = array<i64: 20, 32>}, {transform_indices = @transform_1, window_bounds = array<i64: 20, 1>}, {transform_indices = @transform_2, window_bounds = array<i64: 8, 128>}]} {
    %c0 = arith.constant 0 : index
    %c0_0 = arith.constant 0 : index
    %0 = vector.load %arg1[%c0, %c0_0] : memref<20x32xf32, #tpu.memory_space<vmem>>, vector<20x32xf32>
    %c0_1 = arith.constant 0 : index
    %c0_2 = arith.constant 0 : index
    %1 = vector.load %arg2[%c0_1, %c0_2] : memref<20x1xi32, #tpu.memory_space<vmem>>, vector<20x1xi32>
    %cst = arith.constant dense<0xFF800000> : vector<20xf32>
    %2 = vector.multi_reduction <maximumf>, %0, %cst [1] : vector<20x32xf32> to vector<20xf32>
    %3 = vector.shape_cast %2 : vector<20xf32> to vector<20x1xf32>
    %4 = vector.broadcast %3 : vector<20x1xf32> to vector<20x32xf32>
    %5 = arith.subf %0, %4 : vector<20x32xf32>
    %6 = math.exp %5 : vector<20x32xf32>
    %cst_3 = arith.constant dense<0.000000e+00> : vector<20xf32>
    %7 = vector.multi_reduction <add>, %6, %cst_3 [1] : vector<20x32xf32> to vector<20xf32>
    %8 = vector.shape_cast %7 : vector<20xf32> to vector<20x1xf32>
    %9 = math.log %8 : vector<20x1xf32>
    %10 = tpu.iota {dimensions = array<i32: 1>} : vector<20x32xi32>
    %11 = vector.broadcast %1 : vector<20x1xi32> to vector<20x32xi32>
    %12 = arith.cmpi eq, %10, %11 : vector<20x32xi32>
    %cst_4 = arith.constant 0.000000e+00 : f32
    %13 = vector.broadcast %cst_4 : f32 to vector<20x32xf32>
    %14 = arith.select %12, %5, %13 : vector<20x32xi1>, vector<20x32xf32>
    %cst_5 = arith.constant dense<0.000000e+00> : vector<20xf32>
    %15 = vector.multi_reduction <add>, %14, %cst_5 [1] : vector<20x32xf32> to vector<20xf32>
    %16 = vector.shape_cast %15 : vector<20xf32> to vector<20x1xf32>
    %17 = arith.subf %16, %9 : vector<20x1xf32>
    %18 = math.exp %17 : vector<20x1xf32>
    %cst_6 = arith.constant 1.000000e+00 : f32
    %19 = vector.broadcast %cst_6 : f32 to vector<20x1xf32>
    %20 = arith.subf %19, %18 : vector<20x1xf32>
    %21 = arith.mulf %20, %20 : vector<20x1xf32>
    %22 = arith.mulf %21, %17 : vector<20x1xf32>
    %c20_i32 = arith.constant 20 : i32
    %23 = arith.muli %arg0, %c20_i32 : i32
    %24 = tpu.iota {dimensions = array<i32: 0>} : vector<20x1xi32>
    %25 = vector.broadcast %23 : i32 to vector<20x1xi32>
    %26 = arith.addi %25, %24 : vector<20x1xi32>
    %c20_i32_7 = arith.constant 20 : i32
    %27 = vector.broadcast %c20_i32_7 : i32 to vector<20x1xi32>
    %28 = arith.cmpi slt, %26, %27 : vector<20x1xi32>
    %cst_8 = arith.constant 0.000000e+00 : f32
    %29 = vector.broadcast %cst_8 : f32 to vector<20x1xf32>
    %30 = arith.select %28, %22, %29 : vector<20x1xi1>, vector<20x1xf32>
    %31 = vector.shape_cast %30 : vector<20x1xf32> to vector<1x20x1xf32>
    %cst_9 = arith.constant dense<0.000000e+00> : vector<1xf32>
    %32 = vector.multi_reduction <add>, %31, %cst_9 [1, 2] : vector<1x20x1xf32> to vector<1xf32>
    %33 = vector.shape_cast %32 : vector<1xf32> to vector<1x1x1xf32>
    %34 = vector.extract %33[0, 0, 0] : f32 from vector<1x1x1xf32>
    %35 = vector.broadcast %34 : f32 to vector<8x128xf32>
    %c0_10 = arith.constant 0 : index
    %c0_11 = arith.constant 0 : index
    %36 = vector.load %arg3[%c0_10, %c0_11] : memref<8x128xf32, #tpu.memory_space<vmem>>, vector<8x128xf32>
    tpu.vector_store %arg3[%c0_10, %c0_11], %35 {strides = array<i32>} : memref<8x128xf32, #tpu.memory_space<vmem>>, vector<8x128xf32>,
    return
  }
  func.func @transform_0(%arg0: i32) -> (i32, i32) {
    %c0_i32 = arith.constant 0 : i32
    %c0_i32_0 = arith.constant 0 : i32
    return %arg0, %c0_i32 : i32, i32
  }
  func.func @transform_1(%arg0: i32) -> (i32, i32) {
    %c0_i32 = arith.constant 0 : i32
    %c0_i32_0 = arith.constant 0 : i32
    return %arg0, %c0_i32 : i32, i32
  }
  func.func @transform_2(%arg0: i32) -> (i32, i32) {
    %c0_i32 = arith.constant 0 : i32
    %c0_i32_0 = arith.constant 0 : i32
    return %arg0, %c0_i32 : i32, i32
  }
}

</mosaic_0001>

<llo_original>
// kernel: tpu_custom_call.1
$region0: #{tpu_custom_call.1}
  #allocation0 [shape = 'u32[]', space=smem, size = 0x4, offset = 0x4, fixed_abs, tag = 'smem constant byte address 0x4 - core index']
  #allocation1 [shape = 'u32[144,128]{1,0:T(1,128)}', space=vmem, size = 0x12000, scoped, tag = 'internal scratch']
  %s0 = inlined_call_operand.vmem [shape: f32[20,32], index: 0, kind: input, shape index: {}]
  %s1 = inlined_call_operand.vmem [shape: s32[20,1], index: 1, kind: input, shape index: {}]
  %s2 = inlined_call_operand.hbm [shape: f32[8,128], index: 2, kind: output, shape index: {}]
  %s3 = sld [smem:[#allocation0]]
  $region18: #{tpu_custom_call.1} parent=0
    _
  %s5 = ssub.s32 1, %s3
  %s6 = scalar_select 0, %s5, %s3
  $region1: #{tpu_custom_call.1} parent=0
    #allocation2 [shape = 'u8[4096]{0}', space=vmem, size = 0x1000, scoped, tag = 'output window, operand 0, single buffered']
    #allocation3 [shape = 's32[1]{0}', space=sflag, size = 0x4, scoped, tag = 'scoped memory for tpu_custom_call.1']
    %7 = vsyncpa [#allocation3], 0
    // Predicated region
    $region2: #{tpu_custom_call.1} parent=1 // pred_check
      _
    $region3: #{tpu_custom_call.1} parent=1 // pred_check_branch
      %9 = sbr.rel (0) target = $region5
    $region4: #{tpu_custom_call.1} parent=1 // pred_region
      _
    $region5: #{tpu_custom_call.1} parent=1 // pred_fallthru
      _
    // Predicated region
    $region6: #{tpu_custom_call.1} parent=1 // pred_check
      _
    $region7: #{tpu_custom_call.1} parent=1 // pred_check_branch
      %11 = sbr.rel (0) target = $region9
    $region8: #{tpu_custom_call.1} parent=1 // pred_region
      _
    $region9: #{tpu_custom_call.1} parent=1 // pred_fallthru
      _
    %v12 = vld [vmem:[%s0] sm:$0xff]
    %v13 = vld [vmem:[%s0 + $0x8] sm:$0xff]
    %v14 = vld [vmem:[%s0 + $0x10] sm:$0xf]
    %v15 = vld [vmem:[%s1] sm:$0xff]
    %v16 = vld [vmem:[%s1 + $0x8] sm:$0xff]
    %v17 = vld [vmem:[%s1 + $0x10] sm:$0xf]
    %vm18 = vcmask 261120
    %v19 = vsel %vm18, %v12, -inf
    %20 = vmax.xlane.f32.xlu0 %v19
    %v21 = vpop.xlane.xlu0 %20
    %v22 = vsel %vm18, %v13, -inf
    %23 = vmax.xlane.f32.xlu0 %v22
    %v24 = vpop.xlane.xlu0 %23
    %vm25 = vcmask 257024
    %v26 = vsel %vm25, %v14, -inf
    %27 = vmax.xlane.f32.xlu0 %v26
    %v28 = vpop.xlane.xlu0 %27
    %v29 = vsub.f32 %v12, %v21
    %v30 = vsub.f32 %v13, %v24
    %v31 = vsub.f32 %v14, %v28
    %v32 = vmul.f32 %v29, 1.442695
    %v33 = vpow.pop %v32
    %v34 = vmul.f32 %v30, 1.442695
    %v35 = vpow.pop %v34
    %v36 = vmul.f32 %v31, 1.442695
    %v37 = vpow.pop %v36
    %v38 = vsel %vm18, %v33, 0.0
    %39 = vadd.xlane.f32.xlu0 %v38
    %v40 = vpop.xlane.xlu0 %39
    %v41 = vsel %vm18, %v35, 0.0
    %42 = vadd.xlane.f32.xlu0 %v41
    %v43 = vpop.xlane.xlu0 %42
    %v44 = vsel %vm25, %v37, 0.0
    %45 = vadd.xlane.f32.xlu0 %v44
    %v46 = vpop.xlane.xlu0 %45
    %v47 = vlog2.pop %v40
    %v48 = vmul.f32 %v47, 0.6931472
    %v49 = vlog2.pop %v43
    %v50 = vmul.f32 %v49, 0.6931472
    %v51 = vlog2.pop %v46
    %v52 = vmul.f32 %v51, 0.6931472
    %v53 = vlaneseq
    %v54 = vand.u32 %v53, 127
    %55 = vset.pattern.permute.xlu0 0
    %56 = vperm.xlu0 %55, %v15
    %v57 = vpop.permute.xlu0 %56
    %58 = vset.pattern.permute.xlu0 0
    %59 = vperm.xlu0 %58, %v16
    %v60 = vpop.permute.xlu0 %59
    %61 = vset.pattern.permute.xlu0 0
    %62 = vperm.xlu0 %61, %v17
    %v63 = vpop.permute.xlu0 %62
    %vm64 = vcmp.eq.s32.totalorder %v54, %v57
    %vm65 = vcmp.eq.s32.totalorder %v54, %v60
    %vm66 = vcmp.eq.s32.totalorder %v54, %v63
    %v67 = vsel %vm64, %v29, 0.0
    %v68 = vsel %vm65, %v30, 0.0
    %v69 = vsel %vm66, %v31, 0.0
    %v70 = vsel %vm18, %v67, 0.0
    %71 = vadd.xlane.f32.xlu0 %v70
    %v72 = vpop.xlane.xlu0 %71
    %v73 = vsel %vm18, %v68, 0.0
    %74 = vadd.xlane.f32.xlu0 %v73
    %v75 = vpop.xlane.xlu0 %74
    %v76 = vsel %vm25, %v69, 0.0
    %77 = vadd.xlane.f32.xlu0 %v76
    %v78 = vpop.xlane.xlu0 %77
    %v79 = vsub.f32 %v72, %v48
    %v80 = vsub.f32 %v75, %v50
    %v81 = vsub.f32 %v78, %v52
    %v82 = vmul.f32 %v79, 1.442695
    %v83 = vpow.pop %v82
    %v84 = vmul.f32 %v80, 1.442695
    %v85 = vpow.pop %v84
    %v86 = vmul.f32 %v81, 1.442695
    %v87 = vpow.pop %v86
    %v88 = vsub.f32 1.0, %v83
    %v89 = vsub.f32 1.0, %v85
    %v90 = vsub.f32 1.0, %v87
    %v91 = vmul.f32 %v88, %v88
    %v92 = vmul.f32 %v89, %v89
    %v93 = vmul.f32 %v90, %v90
    %v94 = vmul.f32 %v91, %v79
    %v95 = vmul.f32 %v92, %v80
    %v96 = vmul.f32 %v93, %v81
    %s97 = smul.u32 0, 20
    %v98 = vlaneseq
    %v99 = vshrl.u32 %v98, 7
    %v100 = vadd.s32 %v99, 8
    %v101 = vadd.s32 %v99, 16
    %v102 = vstv %s97
    %v103 = vadd.s32 %v102, %v99
    %v104 = vadd.s32 %v102, %v100
    %v105 = vadd.s32 %v102, %v101
    %vm106 = vcmp.lt.s32.totalorder %v103, 20
    %vm107 = vcmp.lt.s32.totalorder %v104, 20
    %vm108 = vcmp.lt.s32.totalorder %v105, 20
    %v109 = vsel %vm106, %v94, 0.0
    %v110 = vsel %vm107, %v95, 0.0
    %v111 = vsel %vm108, %v96, 0.0
    %vm112 = vcmask 7168
    %v113 = vsel %vm112, %v109, 0.0
    %v114 = vsel %vm112, %v110, 0.0
    %v115 = vadd.f32 %v113, %v114
    %vm116 = vcmask 3072
    %v117 = vsel %vm116, %v111, 0.0
    %v118 = vadd.f32 %v115, %v117
    %119 = vadd.xlane.f32.xlu0 %v118
    %v120 = vpop.xlane.xlu0 %119
    %v121 = vrot.slane %v120, 4
    %v122 = vadd.f32 %v120, %v121
    %v123 = vrot.slane %v122, 2
    %v124 = vadd.f32 %v122, %v123
    %v125 = vrot.slane %v124, 1
    %v126 = vadd.f32 %v124, %v125
    %s127 = vtos %v126
    %v128 = vstv %s127
    %129 = vst [vmem:[#allocation2] sm:$0xff] %v128
    // Predicated region
    $region10: #{tpu_custom_call.1} parent=1 // pred_check
      _
    $region11: #{tpu_custom_call.1} parent=1 // pred_check_branch
      %131 = sbr.rel (0) target = $region13
    $region12: #{tpu_custom_call.1} parent=1 // pred_region
      %s133 = ssub.s32 128, 128
      %134 = vsyncadd [#allocation3], %s133
      %s136 = sshll.u32 [#allocation2], 4
      %s137 = int_to_ptr.vmem [resolvable:$true] %s136
      %139 = dma.vmem_to_hbm [thread:$0]  %s137, 128, %s2, [#allocation3]
    $region13: #{tpu_custom_call.1} parent=1 // pred_fallthru
      _
    // Predicated region
    $region14: #{tpu_custom_call.1} parent=1 // pred_check
      _
    $region15: #{tpu_custom_call.1} parent=1 // pred_check_branch
      %141 = sbr.rel (0) target = $region17
    $region16: #{tpu_custom_call.1} parent=1 // pred_region
      %142 = dma.done [#allocation3], 128
    $region17: #{tpu_custom_call.1} parent=1 // pred_fallthru
      _
    %143 = vsyncpa [#allocation3], 1

</llo_original>
